<compile_context>
chip_gen: v6e
topology: v6e:2x2x1
jax: 0.10.0
libtpu: 0.0.40
codegen_flags: <defaults>
</compile_context>

<pallas_src>
import functools

import jax
import jax.numpy as jnp
from jax.experimental import pallas as pl
from jax.experimental.pallas import tpu as pltpu


def _round_up(x: int, m: int) -> int:
    return (x + m - 1) // m * m


def _choose_tile(dim: int, align: int, cap: int):
    """Pick tile size (multiple of `align`, <= cap) minimizing padding of `dim`.

    Returns (tile, padded_dim) with padded_dim % tile == 0. Ties go to the
    largest tile (better reuse / fewer grid steps).
    """
    cap = max(align, min(cap, _round_up(dim, align)))
    best_t = align
    best_pad = _round_up(dim, align)
    for t in range(align, cap + 1, align):
        padded = _round_up(dim, t)
        if padded < best_pad or (padded == best_pad and t > best_t):
            best_t, best_pad = t, padded
    return best_t, best_pad


def _fused_small_kernel(x_ref, w_ref, b_ref, o_ref):
    """Single-block path: whole problem in VMEM, one matmul + bias + ReLU."""
    y = jnp.dot(x_ref[...], w_ref[...], preferred_element_type=jnp.float32)
    o_ref[...] = jnp.maximum(y + b_ref[...], 0.0).astype(o_ref.dtype)


def _tiled_kernel(x_ref, w_ref, b_ref, o_ref):
    """One (tm, tn) output tile; K is the innermost (arbitrary) grid axis.

    The output block's index_map ignores k, so o_ref stays resident in VMEM
    across the K loop and doubles as the f32 accumulator.
    """
    k = pl.program_id(2)

    @pl.when(k == 0)
    def _init():
        o_ref[...] = jnp.zeros_like(o_ref)

    o_ref[...] += jnp.dot(x_ref[...], w_ref[...],
                          preferred_element_type=jnp.float32)

    @pl.when(k == pl.num_programs(2) - 1)
    def _finalize():
        # Epilogue on the VPU: bias add + ReLU, lane-dense f32 store.
        o_ref[...] = jnp.maximum(o_ref[...] + b_ref[...], 0.0).astype(o_ref.dtype)


@functools.partial(jax.jit, static_argnames=("tm", "tn", "tk", "use_bf16"))
def evidential_layer(x, w, b, *, tm=512, tn=512, tk=1024, use_bf16=True):
    """ReLU(x @ w + b).

    x: (B, in_dim) f32
    w: (in_dim, out_dim) f32   (transpose of nn.Linear weight)
    b: (1, out_dim) f32
    """
    B, K = x.shape
    N = w.shape[1]

    in_dtype = jnp.bfloat16 if use_bf16 else x.dtype
    ib = jnp.dtype(in_dtype).itemsize

    xc = x.astype(in_dtype)
    wc = w.astype(in_dtype)
    bc = b.astype(jnp.float32)

    # ---------------- small-problem fast path ----------------
    # Whole problem as a single VMEM block: no padding, no K grid, no slicing.
    # Estimate footprint with internal (8, 128) layout padding + double buffers.
    Bp8, Kp128, Np128 = _round_up(B, 8), _round_up(K, 128), _round_up(N, 128)
    approx_vmem = (2 * (Bp8 * Kp128 * ib + Kp128 * Np128 * ib + Np128 * 4)
                   + 2 * Bp8 * Np128 * 4)
    if approx_vmem <= 6 * 1024 * 1024:
        return pl.pallas_call(
            _fused_small_kernel,
            out_shape=jax.ShapeDtypeStruct((B, N), jnp.float32),
            grid=(1,),
            in_specs=[
                pl.BlockSpec((B, K), lambda i: (0, 0)),
                pl.BlockSpec((K, N), lambda i: (0, 0)),
                pl.BlockSpec((1, N), lambda i: (0, 0)),
            ],
            out_specs=pl.BlockSpec((B, N), lambda i: (0, 0)),
            cost_estimate=pl.CostEstimate(
                flops=2 * B * K * N,
                transcendentals=0,
                bytes_accessed=ib * (B * K + K * N) + 4 * (N + B * N),
            ),
        )(xc, wc, bc)

    # ---------------- tiled path ----------------
    # Output tile (lane-dense): pad N only to 128 alignment.
    tn_e, Np = _choose_tile(N, 128, tn)
    grid_n = Np // tn_e

    # Batch tile: if the N axis has only one block, cap tm so the batch axis
    # provides >=2 parallel blocks (keeps v7x's second TensorCore busy).
    tm_cap = tm
    if grid_n == 1 and _round_up(B, 8) >= 16:
        tm_cap = min(tm_cap, _round_up(B, 8) // 2)
    tm_e, Bp = _choose_tile(B, 8, tm_cap)
    grid_m = Bp // tm_e

    # K (contraction) tile: lane-aligned; zero-padding is exact.
    tk_e, Kp = _choose_tile(K, 128, tk)
    grid_k = Kp // tk_e

    # Alignment-only zero padding (skipped entirely when shapes are aligned).
    x_p = jnp.pad(xc, ((0, Bp - B), (0, Kp - K))) if (Bp != B or Kp != K) else xc
    w_p = jnp.pad(wc, ((0, Kp - K), (0, Np - N))) if (Kp != K or Np != N) else wc
    b_p = jnp.pad(bc, ((0, 0), (0, Np - N))) if Np != N else bc

    cost = pl.CostEstimate(
        flops=2 * Bp * Kp * Np,
        transcendentals=0,
        # x is re-streamed once per N-tile, w once per M-tile, bias per (i, j).
        bytes_accessed=ib * (Bp * Kp * grid_n + Kp * Np * grid_m)
        + 4 * (Np * grid_m + Bp * Np),
    )

    out_p = pl.pallas_call(
        _tiled_kernel,
        out_shape=jax.ShapeDtypeStruct((Bp, Np), jnp.float32),
        grid_spec=pltpu.PrefetchScalarGridSpec(
            num_scalar_prefetch=0,
            grid=(grid_m, grid_n, grid_k),
            in_specs=[
                pl.BlockSpec((tm_e, tk_e), lambda i, j, k: (i, k)),
                pl.BlockSpec((tk_e, tn_e), lambda i, j, k: (k, j)),
                # Bias: reused across the batch and K grid axes.
                pl.BlockSpec((1, tn_e), lambda i, j, k: (0, j)),
            ],
            out_specs=pl.BlockSpec((tm_e, tn_e), lambda i, j, k: (i, j)),
        ),
        compiler_params=pltpu.CompilerParams(
            dimension_semantics=("parallel", "parallel", "arbitrary"),
        ),
        cost_estimate=cost,
    )(x_p, w_p, b_p)

    # Slice alignment padding back off.
    if Bp != B or Np != N:
        out_p = out_p[:B, :N]
    return out_p


if __name__ == "__main__":
    # Module config: Linear(in_dim -> 2 * num_classes) + ReLU
    batch = 8
    in_dim = 32
    num_classes = 4
    out_dim = 2 * num_classes

    key = jax.random.PRNGKey(0)
    kx, kw, kb = jax.random.split(key, 3)

    # Deterministic parameter init mimicking nn.Linear's U(-1/sqrt(in), 1/sqrt(in)).
    bound = 1.0 / jnp.sqrt(jnp.float32(in_dim))
    w = jax.random.uniform(kw, (in_dim, out_dim), jnp.float32, -bound, bound)
    b = jax.random.uniform(kb, (1, out_dim), jnp.float32, -bound, bound)
    x = jax.random.normal(kx, (batch, in_dim), jnp.float32)

    ref = jnp.maximum(x @ w + b, 0.0)

    # Exact f32 path (single-block fast path), tight tolerance.
    out_f32 = evidential_layer(x, w, b, use_bf16=False)
    jax.block_until_ready(out_f32)
    assert out_f32.shape == (batch, out_dim)
    assert jnp.allclose(out_f32, ref, atol=1e-5, rtol=1e-5)

    # Default bf16-MXU path (f32 accumulation; only input rounding differs).
    out_bf16 = evidential_layer(x, w, b)
    jax.block_until_ready(out_bf16)
    assert jnp.allclose(out_bf16, ref, atol=2e-2, rtol=2e-2)

    # Larger, non-aligned problem that exercises the tiled / K-accumulation
    # path (alignment-only padding, multi-block batch axis, K grid > 1).
    k2x, k2w, k2b = jax.random.split(jax.random.PRNGKey(1), 3)
    B2, K2, N2 = 1030, 1540, 260
    x2 = jax.random.normal(k2x, (B2, K2), jnp.float32)
    w2 = jax.random.normal(k2w, (K2, N2), jnp.float32) * 0.05
    b2 = jax.random.normal(k2b, (1, N2), jnp.float32)
    out2 = evidential_layer(x2, w2, b2)
    jax.block_until_ready(out2)
    ref2 = jnp.maximum(x2 @ w2 + b2, 0.0)
    assert out2.shape == (B2, N2)
    assert jnp.allclose(out2, ref2, atol=8e-2, rtol=5e-2)

    print("KERNEL_OK")
</pallas_src>

<mosaic_0001>
module attributes {stable_mosaic.version = 11 : i64} {
  func.func @_fused_small_kernel(%arg0: i32, %arg1: memref<8x32xf32, #tpu.memory_space<vmem>>, %arg2: memref<32x8xf32, #tpu.memory_space<vmem>>, %arg3: memref<1x8xf32, #tpu.memory_space<vmem>>, %arg4: memref<8x8xf32, #tpu.memory_space<vmem>>) attributes {dimension_semantics = [#tpu.dimension_semantics<arbitrary>], iteration_bounds = array<i64: 1>, scalar_prefetch = 0 : i64, scratch_operands = 0 : i64, tpu.core_type = #tpu.core_type<tc>, window_params = [{pipeline_mode = #tpu.pipeline_mode<synchronous>, transform_indices = @transform_0, window_bounds = array<i64: 8, 32>}, {pipeline_mode = #tpu.pipeline_mode<synchronous>, transform_indices = @transform_1, window_bounds = array<i64: 32, 8>}, {pipeline_mode = #tpu.pipeline_mode<synchronous>, transform_indices = @transform_2, window_bounds = array<i64: 1, 8>}, {pipeline_mode = #tpu.pipeline_mode<synchronous>, transform_indices = @transform_3, window_bounds = array<i64: 8, 8>}]} {
    %c0 = arith.constant 0 : index
    %c0_0 = arith.constant 0 : index
    %0 = vector.load %arg1[%c0, %c0_0] : memref<8x32xf32, #tpu.memory_space<vmem>>, vector<8x32xf32>
    %c0_1 = arith.constant 0 : index
    %c0_2 = arith.constant 0 : index
    %1 = vector.load %arg2[%c0_1, %c0_2] : memref<32x8xf32, #tpu.memory_space<vmem>>, vector<32x8xf32>
    %cst = arith.constant dense<0.000000e+00> : vector<8x8xf32>
    %2 = tpu.matmul %0, %1, %cst {dimension_numbers = #tpu.dot_dimension_numbers<[1], [0], [0], [1], [0, 0, 1, 1], [], []>} : vector<8x32xf32>, vector<32x8xf32>, vector<8x8xf32> -> vector<8x8xf32>
    %c0_3 = arith.constant 0 : index
    %c0_4 = arith.constant 0 : index
    %3 = vector.load %arg3[%c0_3, %c0_4] : memref<1x8xf32, #tpu.memory_space<vmem>>, vector<1x8xf32>
    %4 = vector.broadcast %3 : vector<1x8xf32> to vector<8x8xf32>
    %5 = arith.addf %2, %4 : vector<8x8xf32>
    %cst_5 = arith.constant 0.000000e+00 : f32
    %6 = vector.broadcast %cst_5 : f32 to vector<8x8xf32>
    %7 = arith.maximumf %5, %6 : vector<8x8xf32>
    %c0_6 = arith.constant 0 : index
    %c0_7 = arith.constant 0 : index
    %8 = vector.load %arg4[%c0_6, %c0_7] : memref<8x8xf32, #tpu.memory_space<vmem>>, vector<8x8xf32>
    tpu.vector_store %arg4[%c0_6, %c0_7], %7 {strides = array<i32>} : memref<8x8xf32, #tpu.memory_space<vmem>>, vector<8x8xf32>,
    return
  }
  func.func @transform_0(%arg0: i32) -> (i32, i32) {
    %c0_i32 = arith.constant 0 : i32
    %c0_i32_0 = arith.constant 0 : i32
    %c0_i32_1 = arith.constant 0 : i32
    return %c0_i32, %c0_i32_0 : i32, i32
  }
  func.func @transform_1(%arg0: i32) -> (i32, i32) {
    %c0_i32 = arith.constant 0 : i32
    %c0_i32_0 = arith.constant 0 : i32
    %c0_i32_1 = arith.constant 0 : i32
    return %c0_i32, %c0_i32_0 : i32, i32
  }
  func.func @transform_2(%arg0: i32) -> (i32, i32) {
    %c0_i32 = arith.constant 0 : i32
    %c0_i32_0 = arith.constant 0 : i32
    %c0_i32_1 = arith.constant 0 : i32
    return %c0_i32, %c0_i32_0 : i32, i32
  }
  func.func @transform_3(%arg0: i32) -> (i32, i32) {
    %c0_i32 = arith.constant 0 : i32
    %c0_i32_0 = arith.constant 0 : i32
    %c0_i32_1 = arith.constant 0 : i32
    return %c0_i32, %c0_i32_0 : i32, i32
  }
}

</mosaic_0001>

<llo_original>
// kernel: evidential_layer.1
$region0: #{evidential_layer.1}
  #allocation0 [shape = 'u32[]', space=smem, size = 0x4, offset = 0x4, fixed_abs, tag = 'smem constant byte address 0x4 - core index']
  #allocation1 [shape = 'u32[144,128]{1,0:T(1,128)}', space=vmem, size = 0x12000, scoped, tag = 'internal scratch']
  %s0 = inlined_call_operand.vmem [shape: f32[8,32], index: 0, kind: input, shape index: {}]
  %s1 = inlined_call_operand.vmem [shape: f32[32,8], index: 1, kind: input, shape index: {}]
  %s2 = inlined_call_operand.vmem [shape: f32[1,8], index: 2, kind: input, shape index: {}]
  %s3 = inlined_call_operand.hbm [shape: f32[8,8], index: 3, kind: output, shape index: {}]
  %s4 = sld [smem:[#allocation0]]
  $region22: #{evidential_layer.1} parent=0
    _
  %s6 = ssub.s32 1, %s4
  %s7 = scalar_select 0, %s6, %s4
  $region1: #{evidential_layer.1} parent=0
    #allocation2 [shape = 'u8[4096]{0}', space=vmem, size = 0x1000, scoped, tag = 'output window, operand 0, single buffered']
    #allocation3 [shape = 's32[1]{0}', space=sflag, size = 0x4, scoped, tag = 'scoped memory for evidential_layer.1']
    %8 = vsyncpa [#allocation3], 0
    // Predicated region
    $region2: #{evidential_layer.1} parent=1 // pred_check
      _
    $region3: #{evidential_layer.1} parent=1 // pred_check_branch
      %10 = sbr.rel (0) target = $region5
    $region4: #{evidential_layer.1} parent=1 // pred_region
      _
    $region5: #{evidential_layer.1} parent=1 // pred_fallthru
      _
    // Predicated region
    $region6: #{evidential_layer.1} parent=1 // pred_check
      _
    $region7: #{evidential_layer.1} parent=1 // pred_check_branch
      %12 = sbr.rel (0) target = $region9
    $region8: #{evidential_layer.1} parent=1 // pred_region
      _
    $region9: #{evidential_layer.1} parent=1 // pred_fallthru
      _
    // Predicated region
    $region10: #{evidential_layer.1} parent=1 // pred_check
      _
    $region11: #{evidential_layer.1} parent=1 // pred_check_branch
      %14 = sbr.rel (0) target = $region13
    $region12: #{evidential_layer.1} parent=1 // pred_region
      _
    $region13: #{evidential_layer.1} parent=1 // pred_fallthru
      _
    %v15 = vld [vmem:[%s0] sm:$0xff]
    %v16 = vld [vmem:[%s1] sm:$0xff]
    %v17 = vld [vmem:[%s1 + $0x8] sm:$0xff]
    %v18 = vld [vmem:[%s1 + $0x10] sm:$0xff]
    %v19 = vld [vmem:[%s1 + $0x18] sm:$0xff]
    %v20 = vld [vmem:[%s2] sm:$0x1]
    %v22 = vlaneseq
    %v23 = vshrl.u32 %v22, 7
    %v24 = vsub.s32 0, %v23
    %v25 = vrot.slane %v20, %v24
    %vm27 = vcmask 261120
    %v29 = vsel %vm27, %v15, 0
    %31 = vmatprep.subr.mxu0 0.0
    %32 = vmatpush1.msra.mxu0 0.0
    %33 = vmatprep.subr.mxu0 0.0
    %34 = vmatpush1.msra.mxu0 0.0
    %35 = vmatprep.subr.mxu0 0.0
    %36 = vmatpush1.msra.mxu0 0.0
    %37 = vmatprep.subr.mxu0 0.0
    %38 = vmatpush1.msra.mxu0 0.0
    %39 = vmatprep.subr.mxu0 0.0
    %40 = vmatpush1.msra.mxu0 0.0
    %41 = vmatprep.subr.mxu0 0.0
    %42 = vmatpush1.msra.mxu0 0.0
    %43 = vmatprep.subr.mxu0 0.0
    %44 = vmatpush1.msra.mxu0 0.0
    %45 = vmatprep.subr.mxu0 0.0
    %46 = vmatpush1.msra.mxu0 0.0
    %47 = vmatprep.subr.mxu0 0.0
    %48 = vmatpush1.msra.mxu0 0.0
    %49 = vmatprep.subr.mxu0 0.0
    %50 = vmatpush1.msra.mxu0 0.0
    %51 = vmatprep.subr.mxu0 0.0
    %52 = vmatpush1.msra.mxu0 0.0
    %53 = vmatprep.subr.mxu0 0.0
    %54 = vmatpush1.msra.mxu0 0.0
    %55 = vmatprep.subr.mxu0 0.0
    %56 = vmatpush1.msra.mxu0 %v19
    %57 = vmatprep.subr.mxu0 0.0
    %58 = vmatpush1.msra.mxu0 %v18
    %59 = vmatprep.subr.mxu0 0.0
    %60 = vmatpush1.msra.mxu0 %v17
    %61 = vmatprep.subr.mxu0 0.0
    %62 = vmatpush1.msra.mxu0 %v16
    %63 = vmatprep.subr.mxu0 0.0
    %64 = vmatpush2.msra.mxu0 0.0
    %65 = vmatprep.subr.mxu0 0.0
    %66 = vmatpush2.msra.mxu0 0.0
    %67 = vmatprep.subr.mxu0 0.0
    %68 = vmatpush2.msra.mxu0 0.0
    %69 = vmatprep.subr.mxu0 0.0
    %70 = vmatpush2.msra.mxu0 0.0
    %71 = vmatprep.subr.mxu0 0.0
    %72 = vmatpush2.msra.mxu0 0.0
    %73 = vmatprep.subr.mxu0 0.0
    %74 = vmatpush2.msra.mxu0 0.0
    %75 = vmatprep.subr.mxu0 0.0
    %76 = vmatpush2.msra.mxu0 0.0
    %77 = vmatprep.subr.mxu0 0.0
    %78 = vmatpush2.msra.mxu0 0.0
    %79 = vmatprep.subr.mxu0 0.0
    %80 = vmatpush2.msra.mxu0 0.0
    %81 = vmatprep.subr.mxu0 0.0
    %82 = vmatpush2.msra.mxu0 0.0
    %83 = vmatprep.subr.mxu0 0.0
    %84 = vmatpush2.msra.mxu0 0.0
    %85 = vmatprep.subr.mxu0 0.0
    %86 = vmatpush2.msra.mxu0 0.0
    %87 = vmatprep.subr.mxu0 0.0
    %88 = vmatpush2.msra.mxu0 0.0
    %89 = vmatprep.subr.mxu0 0.0
    %90 = vmatpush2.msra.mxu0 0.0
    %91 = vmatprep.subr.mxu0 0.0
    %92 = vmatpush2.msra.mxu0 0.0
    %93 = vmatprep.subr.mxu0 0.0
    %94 = vmatpush2.msra.mxu0 0.0
    %95 = vmatprep.mubr.f32.mxu0 0.0
    %96 = vmatmul.mubr.f32.gmra.mxu0 %v29
    %v97 = vpop.f32.mrf.mxu0
    %v98 = vadd.f32 %v25, %v97
    %v99 = vpop.f32.mrf.mxu0
    %100 = vdwg.mxu0
    %v101 = vmax.f32 %v98, 0.0
    %vm102 = vcmask 64512
    %103 = vst.msk [vmem:[#allocation2] sm:$0xff] %vm102, %v101
    // Predicated region
    $region14: #{evidential_layer.1} parent=1 // pred_check
      _
    $region15: #{evidential_layer.1} parent=1 // pred_check_branch
      %105 = sbr.rel (0) target = $region17
    $region16: #{evidential_layer.1} parent=1 // pred_region
      %s107 = ssub.s32 128, 128
      %108 = vsyncadd [#allocation3], %s107
      %s110 = sshll.u32 [#allocation2], 4
      %s111 = int_to_ptr.vmem [resolvable:$true] %s110
      %113 = dma.vmem_to_hbm [thread:$0]  %s111, 128, %s3, [#allocation3]
    $region17: #{evidential_layer.1} parent=1 // pred_fallthru
      _
    // Predicated region
    $region18: #{evidential_layer.1} parent=1 // pred_check
      _
    $region19: #{evidential_layer.1} parent=1 // pred_check_branch
      %115 = sbr.rel (0) target = $region21
    $region20: #{evidential_layer.1} parent=1 // pred_region
      %116 = dma.done [#allocation3], 128
    $region21: #{evidential_layer.1} parent=1 // pred_fallthru
      _
    %117 = vsyncpa [#allocation3], 1

</llo_original>
